<compile_context>
chip_gen: v7x
topology: tpu7x:2x2x1
jax: 0.10.0
libtpu: 0.0.40
codegen_flags: <defaults>
</compile_context>

<pallas_src>
import jax
import jax.numpy as jnp
from jax.experimental import pallas as pl
from jax.experimental.pallas import tpu as pltpu


def _affine_kernel(x_ref, scale_ref, bias_ref, o_ref):
    # x_ref: (tile_r, tile_m) tile of the 2-D view of x.
    # scale_ref/bias_ref: (tile_r, 1) per-row params OR (1, tile_m) per-lane
    # params (f32) -- both broadcast cleanly against the x tile.
    x = x_ref[...].astype(jnp.float32)
    o_ref[...] = (x * scale_ref[...] + bias_ref[...]).astype(o_ref.dtype)


def _hw_config():
    """(buffer_budget_bytes, vmem_limit_bytes), tuned per TPU generation."""
    try:
        info = pltpu.get_tpu_info()
        cap = getattr(info, "vmem_capacity_bytes", None)
        if cap is None:
            cap = getattr(info, "vmem_size_bytes", 64 << 20)
    except Exception:
        cap = 64 << 20  # conservative: assume v7x-sized VMEM
    if cap >= (96 << 20):          # v5e / v6e: 128 MiB physical VMEM
        return 40 << 20, 64 << 20
    return 22 << 20, 32 << 20      # v7x: 64 MiB physical, 32 MiB scoped default


def _choose_tiles_row(R, M, itemsize, sublane, budget):
    """Tiles for the per-row layout (R = N*C rows, M = H*W lanes, M % 128 == 0).

    Budget accounting (double-buffered): x-in + out blocks, plus the two
    (tile_r, 1) param blocks which lane-pad to 128 lanes in VMEM.
    """
    per_elem = 4 * itemsize            # x in + out, double-buffered
    per_row_param = 2 * 2 * 128 * 4    # scale + bias, lane-padded, double-buffered

    def row_cost(tm):
        return per_elem * tm + per_row_param

    if row_cost(M) * sublane <= budget:
        tile_m = M                     # whole rows fit with >= `sublane` of them
    else:
        tile_m = ((budget // sublane - per_row_param) // per_elem) // 128 * 128
        tile_m = min(M, max(128, tile_m))

    rows = max(1, budget // row_cost(tile_m))
    if R <= rows:
        tile_r = R                     # full dim -- always legal
    else:
        tile_r = max(sublane, (rows // sublane) * sublane)
    return tile_r, tile_m


def _choose_tiles_lane(R, M, itemsize, sublane, budget):
    """Tiles for the lane-dense layout (R = N rows, M = C*H*W lanes).

    The (1, tile_m) param slabs sublane-pad to 8 rows in VMEM; account for it.
    """
    tile_r = R if R <= 32 else 32      # 32 is a legal sublane multiple for all dtypes
    per_col = 4 * itemsize * tile_r + 2 * 2 * 8 * 4
    lanes = max(128, (budget // per_col) // 128 * 128)
    tile_m = M if M <= lanes else lanes
    return tile_r, tile_m


def _ensure_two_blocks(R, M, tile_r, tile_m, sublane):
    """Guarantee >=2 grid blocks (when legally possible) so v7x's two
    TensorCores can both be used via dimension_semantics=("parallel","parallel")."""
    if pl.cdiv(R, tile_r) * pl.cdiv(M, tile_m) > 1:
        return tile_r, tile_m
    if M >= 256:
        tile_m = ((pl.cdiv(M, 2) + 127) // 128) * 128
    elif R >= 2 * sublane:
        tile_r = ((pl.cdiv(R, 2) + sublane - 1) // sublane) * sublane
    return tile_r, tile_m


def frozen_batch_norm_2d(x, weight, bias, running_mean, running_var, eps=1e-5):
    """x: (N, C, H, W); per-channel buffers: (C,). Returns same shape/dtype as x."""
    N, C, H, W = x.shape
    HW = H * W

    # Fold the four frozen buffers into a per-channel affine (f32 for accuracy).
    w32 = weight.astype(jnp.float32)
    b32 = bias.astype(jnp.float32)
    rm32 = running_mean.astype(jnp.float32)
    rv32 = running_var.astype(jnp.float32)
    scale_c = w32 * jax.lax.rsqrt(rv32 + jnp.float32(eps))    # (C,)
    bias_c = b32 - rm32 * scale_c                             # (C,)

    itemsize = x.dtype.itemsize
    sublane = 8 * max(1, 4 // max(1, itemsize))               # 8 f32 / 16 bf16 / 32 int8
    budget, vmem_limit = _hw_config()

    lane_dense = (HW % 128 != 0)
    if lane_dense:
        # Lane-dense layout: (N, C*H*W) with a per-lane (1, C*H*W) param slab.
        R, M = N, C * HW
        x2 = x.reshape(R, M)
        scale_p = jnp.repeat(scale_c, HW).reshape(1, M)
        bias_p = jnp.repeat(bias_c, HW).reshape(1, M)
        tile_r, tile_m = _choose_tiles_lane(R, M, itemsize, sublane, budget)
        tile_r, tile_m = _ensure_two_blocks(R, M, tile_r, tile_m, sublane)
        param_block = (1, tile_m)
        param_map = lambda i, j: (0, j)
    else:
        # Per-row layout: (N*C, H*W) with per-row (N*C, 1) params.
        R, M = N * C, HW
        x2 = x.reshape(R, M)
        scale_p = jnp.tile(scale_c, N).reshape(R, 1)
        bias_p = jnp.tile(bias_c, N).reshape(R, 1)
        tile_r, tile_m = _choose_tiles_row(R, M, itemsize, sublane, budget)
        tile_r, tile_m = _ensure_two_blocks(R, M, tile_r, tile_m, sublane)
        param_block = (tile_r, 1)
        param_map = lambda i, j: (i, 0)   # constant over inner j -> no re-DMA

    grid = (pl.cdiv(R, tile_r), pl.cdiv(M, tile_m))

    # TODO(synk): if the caller can donate x, input_output_aliases={0: 0} halves
    # the HBM footprint of this op (relevant on 16 GiB v5e parts).
    out = pl.pallas_call(
        _affine_kernel,
        out_shape=jax.ShapeDtypeStruct((R, M), x.dtype),
        grid_spec=pltpu.PrefetchScalarGridSpec(
            num_scalar_prefetch=0,
            grid=grid,
            in_specs=[
                pl.BlockSpec((tile_r, tile_m), lambda i, j: (i, j)),  # x tile
                pl.BlockSpec(param_block, param_map),                 # scale
                pl.BlockSpec(param_block, param_map),                 # bias
            ],
            out_specs=pl.BlockSpec((tile_r, tile_m), lambda i, j: (i, j)),
        ),
        compiler_params=pltpu.CompilerParams(
            # Both grid axes are fully independent -> shard across v7x's 2 TCs
            # (no-op on single-TC v5e/v6e).
            dimension_semantics=("parallel", "parallel"),
            vmem_limit_bytes=vmem_limit,
        ),
    )(x2, scale_p, bias_p)

    return out.reshape(N, C, H, W)


def _reference(x, weight, bias, running_mean, running_var, eps=1e-5):
    w = weight.reshape(1, -1, 1, 1).astype(jnp.float32)
    b = bias.reshape(1, -1, 1, 1).astype(jnp.float32)
    rv = running_var.reshape(1, -1, 1, 1).astype(jnp.float32)
    rm = running_mean.reshape(1, -1, 1, 1).astype(jnp.float32)
    scale = w * jax.lax.rsqrt(rv + eps)
    return (x.astype(jnp.float32) * scale + (b - rm * scale)).astype(x.dtype)


if __name__ == "__main__":
    key = jax.random.PRNGKey(0)
    kx, kw, kb, km, kv = jax.random.split(key, 5)

    # Test 1: NCHW float32, H*W multiple of 128 -> per-row layout.
    N, C, H, W = 2, 4, 16, 16
    x = jax.random.normal(kx, (N, C, H, W), dtype=jnp.float32)
    weight = 1.0 + 0.1 * jax.random.normal(kw, (C,), dtype=jnp.float32)
    bias = 0.1 * jax.random.normal(kb, (C,), dtype=jnp.float32)
    running_mean = 0.5 * jax.random.normal(km, (C,), dtype=jnp.float32)
    running_var = jax.random.uniform(kv, (C,), dtype=jnp.float32,
                                     minval=0.5, maxval=1.5)
    y = jax.block_until_ready(
        frozen_batch_norm_2d(x, weight, bias, running_mean, running_var))
    y_ref = _reference(x, weight, bias, running_mean, running_var)
    assert y.shape == (N, C, H, W) and y.dtype == x.dtype
    assert jnp.allclose(y, y_ref, atol=1e-5, rtol=1e-5)

    # Test 2: odd spatial (H*W = 35, not 128-aligned) -> lane-dense layout.
    N2, C2, H2, W2 = 2, 3, 5, 7
    x_b = jax.random.normal(kx, (N2, C2, H2, W2), dtype=jnp.float32)
    w_b = 1.0 + 0.1 * jax.random.normal(kw, (C2,), dtype=jnp.float32)
    b_b = 0.1 * jax.random.normal(kb, (C2,), dtype=jnp.float32)
    m_b = 0.5 * jax.random.normal(km, (C2,), dtype=jnp.float32)
    v_b = jax.random.uniform(kv, (C2,), dtype=jnp.float32, minval=0.5, maxval=1.5)
    y_b = jax.block_until_ready(frozen_batch_norm_2d(x_b, w_b, b_b, m_b, v_b))
    assert jnp.allclose(y_b, _reference(x_b, w_b, b_b, m_b, v_b),
                        atol=1e-5, rtol=1e-5)

    # Test 3: bf16 activations (sublane packing = 16), f32 params.
    N3, C3, H3, W3 = 2, 8, 16, 16
    x_c = jax.random.normal(kx, (N3, C3, H3, W3), dtype=jnp.bfloat16)
    w_c = 1.0 + 0.1 * jax.random.normal(kw, (C3,), dtype=jnp.float32)
    b_c = 0.1 * jax.random.normal(kb, (C3,), dtype=jnp.float32)
    m_c = 0.5 * jax.random.normal(km, (C3,), dtype=jnp.float32)
    v_c = jax.random.uniform(kv, (C3,), dtype=jnp.float32, minval=0.5, maxval=1.5)
    y_c = jax.block_until_ready(frozen_batch_norm_2d(x_c, w_c, b_c, m_c, v_c))
    assert y_c.dtype == jnp.bfloat16
    assert jnp.allclose(y_c.astype(jnp.float32),
                        _reference(x_c, w_c, b_c, m_c, v_c).astype(jnp.float32),
                        atol=1e-2, rtol=1e-2)

    print("KERNEL_OK")
</pallas_src>

<mosaic_0001>
module attributes {stable_mosaic.version = 11 : i64} {
  func.func @_affine_kernel(%arg0: i32, %arg1: i32, %arg2: memref<8x128xf32, #tpu.memory_space<vmem>>, %arg3: memref<8x1xf32, #tpu.memory_space<vmem>>, %arg4: memref<8x1xf32, #tpu.memory_space<vmem>>, %arg5: memref<8x128xf32, #tpu.memory_space<vmem>>) attributes {dimension_semantics = [#tpu.dimension_semantics<parallel>, #tpu.dimension_semantics<parallel>], iteration_bounds = array<i64: 1, 2>, scalar_prefetch = 0 : i64, scratch_operands = 0 : i64, tpu.core_type = #tpu.core_type<tc>, window_params = [{transform_indices = @transform_0, window_bounds = array<i64: 8, 128>}, {transform_indices = @transform_1, window_bounds = array<i64: 8, 1>}, {transform_indices = @transform_2, window_bounds = array<i64: 8, 1>}, {transform_indices = @transform_3, window_bounds = array<i64: 8, 128>}]} {
    %c0 = arith.constant 0 : index
    %c0_0 = arith.constant 0 : index
    %0 = vector.load %arg2[%c0, %c0_0] : memref<8x128xf32, #tpu.memory_space<vmem>>, vector<8x128xf32>
    %c0_1 = arith.constant 0 : index
    %c0_2 = arith.constant 0 : index
    %1 = vector.load %arg3[%c0_1, %c0_2] : memref<8x1xf32, #tpu.memory_space<vmem>>, vector<8x1xf32>
    %2 = vector.broadcast %1 : vector<8x1xf32> to vector<8x128xf32>
    %3 = arith.mulf %0, %2 : vector<8x128xf32>
    %c0_3 = arith.constant 0 : index
    %c0_4 = arith.constant 0 : index
    %4 = vector.load %arg4[%c0_3, %c0_4] : memref<8x1xf32, #tpu.memory_space<vmem>>, vector<8x1xf32>
    %5 = vector.broadcast %4 : vector<8x1xf32> to vector<8x128xf32>
    %6 = arith.addf %3, %5 : vector<8x128xf32>
    %c0_5 = arith.constant 0 : index
    %c0_6 = arith.constant 0 : index
    %7 = vector.load %arg5[%c0_5, %c0_6] : memref<8x128xf32, #tpu.memory_space<vmem>>, vector<8x128xf32>
    tpu.vector_store %arg5[%c0_5, %c0_6], %6 {strides = array<i32>} : memref<8x128xf32, #tpu.memory_space<vmem>>, vector<8x128xf32>,
    return
  }
  func.func @transform_0(%arg0: i32, %arg1: i32) -> (i32, i32) {
    %c0_i32 = arith.constant 0 : i32
    return %arg0, %arg1 : i32, i32
  }
  func.func @transform_1(%arg0: i32, %arg1: i32) -> (i32, i32) {
    %c0_i32 = arith.constant 0 : i32
    %c0_i32_0 = arith.constant 0 : i32
    return %arg0, %c0_i32 : i32, i32
  }
  func.func @transform_2(%arg0: i32, %arg1: i32) -> (i32, i32) {
    %c0_i32 = arith.constant 0 : i32
    %c0_i32_0 = arith.constant 0 : i32
    return %arg0, %c0_i32 : i32, i32
  }
  func.func @transform_3(%arg0: i32, %arg1: i32) -> (i32, i32) {
    %c0_i32 = arith.constant 0 : i32
    return %arg0, %arg1 : i32, i32
  }
}

</mosaic_0001>

<llo_original>
// kernel: tpu_custom_call.1
$region0: #{tpu_custom_call.1}
  #allocation0 [shape = 'u32[]', space=smem, size = 0x4, offset = 0x4, fixed_abs, tag = 'smem constant byte address 0x4 - core index']
  #allocation1 [shape = 'u32[144,128]{1,0:T(1,128)}', space=vmem, size = 0x12000, scoped, tag = 'internal scratch']
  %s0 = inlined_call_operand.vmem [shape: f32[8,256], index: 0, kind: input, shape index: {}]
  %s1 = inlined_call_operand.vmem [shape: f32[8,1], index: 1, kind: input, shape index: {}]
  %s2 = inlined_call_operand.vmem [shape: f32[8,1], index: 2, kind: input, shape index: {}]
  %s3 = inlined_call_operand.hbm [shape: f32[8,256], index: 3, kind: output, shape index: {}]
  %s4 = sld [smem:[#allocation0]]
  $region45: #{tpu_custom_call.1} parent=0
    _
  %s6 = ssub.s32 1, %s4
  %s7 = scalar_select 0, %s6, %s4
  $region1: #{tpu_custom_call.1} parent=0
    #allocation2 [shape = 'u8[8192]{0}', space=vmem, size = 0x2000, scoped, tag = 'output window, operand 0']
    #allocation3 [shape = 's32[2]{0}', space=sflag, size = 0x8, scoped, tag = 'scoped memory for tpu_custom_call.1']
    %8 = vsyncpa [#allocation3], 0
    %s9 = scalar_lea.sflag [#allocation3], 1
    %10 = vsyncpa %s9, 0
    loop: start=0, step=1, limit=4
    $region2: #{tpu_custom_call.1} parent=1 // loop_pre_header
      _
    $region3: #{tpu_custom_call.1} parent=1 // loop_header
      %s12 = sphi 0, %s16
      %p13 = scmp.ge.s32.totalorder %s12, 4
      %s19 = sphi 0, %s31
      %s20 = sphi 0, %s27
      %s21 = sphi 0, %s19
      %s22 = sphi 0, %s20
      %s23 = sphi 0, %s21
      %s24 = sphi 0, %s22
      %s36 = sphi 0, %s38
      %s39 = sphi 0, %s36
      %s40 = sphi 0, %s39
      %s56 = sphi 0, %s40
      %s62 = sphi 0, %s64
      %s65 = sphi 0, %s62
      %s66 = sphi 0, %s65
      %s82 = sphi 0, %s66
      %s88 = sphi 0, %s90
      %s91 = sphi 0, %s88
      %s92 = sphi 0, %s91
      %s108 = sphi 0, %s92
      %s116 = sphi 0, %s118
      %s119 = sphi 0, %s116
      %s120 = sphi 0, %s119
      %s136 = sphi 0, %s120
    $region4: #{tpu_custom_call.1} parent=1 // loop_header_branch
      %15 = sbr.rel (%p13) target = $region8
    $region5: #{tpu_custom_call.1} parent=1 // loop_body
      %s17 = ssub.s32 %s12, 1
      %s18 = ssub.s32 %s12, 2
      %s25 = sadd.s32 1, %s20
      %p26 = scmp.ge.s32.totalorder %s25, 2
      %s27 = scalar_select %p26, 0, %s25
      %s28 = sadd.s32 1, %s19
      %s29 = scalar_select %p26, %s28, %s19
      %p30 = scmp.ge.s32.totalorder %s29, 1
      %s31 = scalar_select %p30, 0, %s29
      %s32 = ssub.s32 %s19, %s31
      %s33 = ssub.s32 %s20, %s27
      %s34 = sor.u32 %s32, %s33
      %p35 = scmp.eq.s32.totalorder %s34, 0
      %s37 = sadd.s32 %s36, 1
      %s38 = scalar_select %p35, %s36, %s37
      %p41 = pneg %p35
      %p42 = scmp.eq.s32.totalorder %s12, 1
      %p43 = por %p41, %p42
      %p44 = scmp.ne.s32.totalorder %s36, %s39
      %p45 = scmp.eq.s32.totalorder %s12, 0
      %p46 = por %p44, %p45
      %p47 = scmp.ne.s32.totalorder %s36, %s39
      %p48 = scmp.eq.s32.totalorder %s17, 1
      %p49 = por %p47, %p48
      %p50 = scmp.ne.s32.totalorder %s39, %s40
      %p51 = scmp.eq.s32.totalorder %s17, 0
      %p52 = por %p50, %p51
      %p53 = scmp.ne.s32.totalorder %s39, %s40
      %p54 = scmp.eq.s32.totalorder %s18, 1
      %p55 = por %p53, %p54
      %p57 = scmp.ne.s32.totalorder %s40, %s56
      %p58 = scmp.eq.s32.totalorder %s18, 0
      %p59 = por %p57, %p58
      %s60 = ssub.s32 %s19, %s31
      %p61 = scmp.eq.s32.totalorder %s60, 0
      %s63 = sadd.s32 %s62, 1
      %s64 = scalar_select %p61, %s62, %s63
      %p67 = pneg %p61
      %p68 = scmp.eq.s32.totalorder %s12, 1
      %p69 = por %p67, %p68
      %p70 = scmp.ne.s32.totalorder %s62, %s65
      %p71 = scmp.eq.s32.totalorder %s12, 0
      %p72 = por %p70, %p71
      %p73 = scmp.ne.s32.totalorder %s62, %s65
      %p74 = scmp.eq.s32.totalorder %s17, 1
      %p75 = por %p73, %p74
      %p76 = scmp.ne.s32.totalorder %s65, %s66
      %p77 = scmp.eq.s32.totalorder %s17, 0
      %p78 = por %p76, %p77
      %p79 = scmp.ne.s32.totalorder %s65, %s66
      %p80 = scmp.eq.s32.totalorder %s18, 1
      %p81 = por %p79, %p80
      %p83 = scmp.ne.s32.totalorder %s66, %s82
      %p84 = scmp.eq.s32.totalorder %s18, 0
      %p85 = por %p83, %p84
      %s86 = ssub.s32 %s19, %s31
      %p87 = scmp.eq.s32.totalorder %s86, 0
      %s89 = sadd.s32 %s88, 1
      %s90 = scalar_select %p87, %s88, %s89
      %p93 = pneg %p87
      %p94 = scmp.eq.s32.totalorder %s12, 1
      %p95 = por %p93, %p94
      %p96 = scmp.ne.s32.totalorder %s88, %s91
      %p97 = scmp.eq.s32.totalorder %s12, 0
      %p98 = por %p96, %p97
      %p99 = scmp.ne.s32.totalorder %s88, %s91
      %p100 = scmp.eq.s32.totalorder %s17, 1
      %p101 = por %p99, %p100
      %p102 = scmp.ne.s32.totalorder %s91, %s92
      %p103 = scmp.eq.s32.totalorder %s17, 0
      %p104 = por %p102, %p103
      %p105 = scmp.ne.s32.totalorder %s91, %s92
      %p106 = scmp.eq.s32.totalorder %s18, 1
      %p107 = por %p105, %p106
      %p109 = scmp.ne.s32.totalorder %s92, %s108
      %p110 = scmp.eq.s32.totalorder %s18, 0
      %p111 = por %p109, %p110
      %s112 = ssub.s32 %s19, %s31
      %s113 = ssub.s32 %s20, %s27
      %s114 = sor.u32 %s112, %s113
      %p115 = scmp.eq.s32.totalorder %s114, 0
      %s117 = sadd.s32 %s116, 1
      %s118 = scalar_select %p115, %s116, %s117
      %p121 = pneg %p115
      %p122 = scmp.eq.s32.totalorder %s12, 1
      %p123 = por %p121, %p122
      %p124 = scmp.ne.s32.totalorder %s116, %s119
      %p125 = scmp.eq.s32.totalorder %s12, 0
      %p126 = por %p124, %p125
      %p127 = scmp.ne.s32.totalorder %s116, %s119
      %p128 = scmp.eq.s32.totalorder %s17, 1
      %p129 = por %p127, %p128
      %p130 = scmp.ne.s32.totalorder %s119, %s120
      %p131 = scmp.eq.s32.totalorder %s17, 0
      %p132 = por %p130, %p131
      %p133 = scmp.ne.s32.totalorder %s119, %s120
      %p134 = scmp.eq.s32.totalorder %s18, 1
      %p135 = por %p133, %p134
      %p137 = scmp.ne.s32.totalorder %s120, %s136
      %p138 = scmp.eq.s32.totalorder %s18, 0
      %p139 = por %p137, %p138
      %p140 = scmp.le.s32.totalorder 1, %s12
      %p141 = scmp.lt.s32.totalorder %s12, 3
      %p142 = pnand %p140, %p141
      %p143 = pneg %p142
      // Predicated region
      $region9: #{tpu_custom_call.1} parent=5 // pred_check
        _
      $region10: #{tpu_custom_call.1} parent=5 // pred_check_branch
        %145 = sbr.rel (%p142) target = $region12
      $region11: #{tpu_custom_call.1} parent=5 // pred_region
        %s146 = ssub.s32 %s12, 1
        // Predicated region
        $region13: #{tpu_custom_call.1} parent=11 // pred_check
          %p147 = pneg %p78
        $region14: #{tpu_custom_call.1} parent=11 // pred_check_branch
          %149 = sbr.rel (%p147) target = $region16
        $region15: #{tpu_custom_call.1} parent=11 // pred_region
          %p150 = scmp.lt.s32.totalorder %s21, 0
          %s151 = scalar_select %p150, %s21, 0
          %s152 = smul.addr %s151, 8
          %s153 = scalar_lea.vmem %s1, %s152
        $region16: #{tpu_custom_call.1} parent=11 // pred_fallthru
          _
        // Predicated region
        $region17: #{tpu_custom_call.1} parent=11 // pred_check
          %p154 = pneg %p104
        $region18: #{tpu_custom_call.1} parent=11 // pred_check_branch
          %156 = sbr.rel (%p154) target = $region20
        $region19: #{tpu_custom_call.1} parent=11 // pred_region
          %p157 = scmp.lt.s32.totalorder %s21, 0
          %s158 = scalar_select %p157, %s21, 0
          %s159 = smul.addr %s158, 8
          %s160 = scalar_lea.vmem %s2, %s159
        $region20: #{tpu_custom_call.1} parent=11 // pred_fallthru
          _
      $region12: #{tpu_custom_call.1} parent=5 // pred_fallthru
        _
      %p161 = scmp.lt.s32.totalorder %s12, 2
      // Predicated region
      $region21: #{tpu_custom_call.1} parent=5 // pred_check
        %p162 = pneg %p161
      $region22: #{tpu_custom_call.1} parent=5 // pred_check_branch
        %164 = sbr.rel (%p162) target = $region24
      $region23: #{tpu_custom_call.1} parent=5 // pred_region
        // Predicated region
        $region25: #{tpu_custom_call.1} parent=23 // pred_check
          %p165 = pneg %p46
        $region26: #{tpu_custom_call.1} parent=23 // pred_check_branch
          %167 = sbr.rel (%p165) target = $region28
        $region27: #{tpu_custom_call.1} parent=23 // pred_region
          %p168 = scmp.lt.s32.totalorder %s19, 0
          %s169 = scalar_select %p168, %s19, 0
          %p170 = scmp.lt.s32.totalorder %s20, 1
          %s171 = scalar_select %p170, %s20, 1
          %s172 = smul.addr %s169, 2
          %s173 = sadd.s32 %s171, %s172
          %s174 = smul.addr %s173, 8
          %s175 = scalar_lea.vmem %s0, %s174
        $region28: #{tpu_custom_call.1} parent=23 // pred_fallthru
          _
      $region24: #{tpu_custom_call.1} parent=5 // pred_fallthru
        _
      %p176 = scmp.le.s32.totalorder 1, %s12
      %p177 = scmp.lt.s32.totalorder %s12, 3
      %p178 = pnand %p176, %p177
      %p179 = pneg %p178
      // Predicated region
      $region29: #{tpu_custom_call.1} parent=5 // pred_check
        _
      $region30: #{tpu_custom_call.1} parent=5 // pred_check_branch
        %181 = sbr.rel (%p178) target = $region32
      $region31: #{tpu_custom_call.1} parent=5 // pred_region
        %s182 = ssub.s32 %s12, 1
        %p183 = scmp.lt.s32.totalorder %s21, 0
        %s184 = scalar_select %p183, %s21, 0
        %p185 = scmp.lt.s32.totalorder %s22, 1
        %s186 = scalar_select %p185, %s22, 1
        %s187 = smul.addr %s184, 2
        %s188 = sadd.s32 %s186, %s187
        %s189 = smul.addr %s188, 8
        %s190 = scalar_lea.vmem %s0, %s189
        %p191 = pneg %p52
        %p192 = pneg %p49
        %p193 = scmp.lt.s32.totalorder %s21, 0
        %s194 = scalar_select %p193, %s21, 0
        %s195 = smul.addr %s194, 8
        %s196 = scalar_lea.vmem %s1, %s195
        %p197 = pneg %p78
        %p198 = pneg %p75
        %p199 = scmp.lt.s32.totalorder %s21, 0
        %s200 = scalar_select %p199, %s21, 0
        %s201 = smul.addr %s200, 8
        %s202 = scalar_lea.vmem %s2, %s201
        %p203 = pneg %p104
        %p204 = pneg %p101
        %p205 = pneg %p132
        %p206 = pneg %p129
        %s207 = sand.u32 %s119, 1
        %s208 = scalar_lea.sflag [#allocation3], %s207
        %s209 = sand.u32 %s119, 1
        %s210 = smul.addr %s209, 8
        %s211 = scalar_lea.vmem [#allocation2], %s210
        %p212 = scmp.lt.s32.totalorder %s21, 0
        %s213 = scalar_select %p212, %s21, 0
        %p214 = scmp.lt.s32.totalorder %s22, 1
        %s215 = scalar_select %p214, %s22, 1
        %s216 = smul.addr %s213, 2
        %s217 = sadd.s32 %s215, %s216
        %s218 = smul.addr %s217, 8
        %s219 = scalar_lea.vmem %s0, %s218
        %p220 = scmp.lt.s32.totalorder %s21, 0
        %s221 = scalar_select %p220, %s21, 0
        %s222 = smul.addr %s221, 8
        %s223 = scalar_lea.vmem %s1, %s222
        %p224 = scmp.lt.s32.totalorder %s21, 0
        %s225 = scalar_select %p224, %s21, 0
        %s226 = smul.addr %s225, 8
        %s227 = scalar_lea.vmem %s2, %s226
        %v228 = vld [vmem:[%s219] sm:$0xff]
        %v229 = vld [vmem:[%s223] sm:$0xff]
        %231 = vset.pattern.permute.xlu0 0
        %232 = vperm.xlu0 %231, %v229
        %v233 = vpop.permute.xlu0 %232
        %v235 = vmul.f32 %v228, %v233
        %v236 = vld [vmem:[%s227] sm:$0xff]
        %238 = vset.pattern.permute.xlu0 0
        %239 = vperm.xlu0 %238, %v236
        %v240 = vpop.permute.xlu0 %239
        %v242 = vadd.f32 %v235, %v240
        %243 = vst [vmem:[%s211] sm:$0xff] %v242
        %s244 = sand.u32 %s119, 1
        %s245 = scalar_lea.sflag [#allocation3], %s244
        %s246 = sand.u32 %s119, 1
        %s247 = smul.addr %s246, 8
        %s248 = scalar_lea.vmem [#allocation2], %s247
        // Predicated region
        $region33: #{tpu_custom_call.1} parent=31 // pred_check
          %p249 = pneg %p129
        $region34: #{tpu_custom_call.1} parent=31 // pred_check_branch
          %251 = sbr.rel (%p249) target = $region36
        $region35: #{tpu_custom_call.1} parent=31 // pred_region
          %s253 = ssub.s32 128, 128
          %254 = vsyncadd %s245, %s253
          %s255 = smul.addr %s21, 2
          %s256 = sadd.s32 %s22, %s255
          %s257 = smul.addr %s256, 128
          %s258 = scalar_lea.hbm %s3, %s257
          %s260 = sshll.u32 %s248, 4
          %s261 = int_to_ptr.vmem [resolvable:$true] %s260
          %263 = dma.vmem_to_hbm [thread:$0]  %s261, 128, %s258, %s245
        $region36: #{tpu_custom_call.1} parent=31 // pred_fallthru
          _
      $region32: #{tpu_custom_call.1} parent=5 // pred_fallthru
        _
      %p264 = scmp.le.s32.totalorder 2, %s12
      // Predicated region
      $region37: #{tpu_custom_call.1} parent=5 // pred_check
        %p265 = pneg %p264
      $region38: #{tpu_custom_call.1} parent=5 // pred_check_branch
        %267 = sbr.rel (%p265) target = $region40
      $region39: #{tpu_custom_call.1} parent=5 // pred_region
        %s268 = ssub.s32 %s12, 2
        // Predicated region
        $region41: #{tpu_custom_call.1} parent=39 // pred_check
          %p269 = pneg %p135
        $region42: #{tpu_custom_call.1} parent=39 // pred_check_branch
          %271 = sbr.rel (%p269) target = $region44
        $region43: #{tpu_custom_call.1} parent=39 // pred_region
          %s272 = sand.u32 %s120, 1
          %s273 = scalar_lea.sflag [#allocation3], %s272
          %s274 = sand.u32 %s120, 1
          %s275 = smul.addr %s274, 8
          %s276 = scalar_lea.vmem [#allocation2], %s275
          %277 = dma.done %s273, 128
        $region44: #{tpu_custom_call.1} parent=39 // pred_fallthru
          _
      $region40: #{tpu_custom_call.1} parent=5 // pred_fallthru
        _
    $region6: #{tpu_custom_call.1} parent=1 // loop_footer
      %s16 = sadd.s32 1, %s12
    $region7: #{tpu_custom_call.1} parent=1 // loop_footer_branch
      %11 = sbr.rel target = $region3
    $region8: #{tpu_custom_call.1} parent=1 // loop_exit
      _
    %278 = vsyncpa [#allocation3], 1
    %s279 = scalar_lea.sflag [#allocation3], 1
    %280 = vsyncpa %s279, 1

</llo_original>
